<compile_context>
chip_gen: v5e
topology: v5e:2x2
jax: 0.10.0
libtpu: 0.0.40
codegen_flags: <defaults>
</compile_context>

<pallas_src>
import functools

import jax
import jax.numpy as jnp
from jax import lax
from jax.experimental import pallas as pl
from jax.experimental.pallas import tpu as pltpu

# ----------------------------------------------------------------------------
# Dimensions
# ----------------------------------------------------------------------------
BATCH = 128          # >=128 rows fills one MXU M-pass and amortizes launch cost
D_IN = 32
D_HID = 64
D_OUT = 16

_LANE = 128
_SUBLANE = 8

MAX_NORM = 100.0                               # grad_hook: clip_grad_norm(grad, 100)

_FUSED_CLIP_LIMIT_BYTES = 4 * 1024 * 1024      # grads this small: one fused kernel
_CLIP_TILE_BYTES = 2 * 1024 * 1024             # streaming tile target (v6e/v7x sweet spot)


def _round_up(x, m):
    return ((x + m - 1) // m) * m


def _cdiv(a, b):
    return (a + b - 1) // b


D_HID_P = _round_up(D_HID, _LANE)              # 128: lane-dense hidden for both MXU passes


# ----------------------------------------------------------------------------
# Kernel 1: fused user-model forward  out = relu(x @ W1 + b1) @ W2 + b2
# Weight refs come from the [2, ...] PS buffers; the BlockSpec squeezes slot 0.
# ----------------------------------------------------------------------------
def _mlp_kernel(x_ref, w1_ref, b1_ref, w2_ref, b2_ref, o_ref):
    h = jnp.dot(x_ref[...], w1_ref[...], preferred_element_type=jnp.float32)
    h = jnp.maximum(h + b1_ref[...], 0.0)
    y = jnp.dot(h, w2_ref[...], preferred_element_type=jnp.float32) + b2_ref[...]
    # TODO(synk): on v6e/v7x, bf16 inputs to the two dots run the MXU at native
    # rate once the batch scales; kept f32 here to match the module's numerics.
    o_ref[...] = y.astype(o_ref.dtype)


def _pick_bm(b):
    if b >= 256:
        return 256        # fill the 256-wide MXU M-pass; gives v7x's 2 TCs work to split
    if b >= 128:
        return 128
    return max(_SUBLANE, _round_up(b, _SUBLANE))


def user_model_forward(x, w1_buf, b1_buf, w2_buf, b2_buf):
    """x: [B, D_IN]; *_buf: PS buffers [2, ...] (slot 0 = live parameter).

    The "pull" of slot 0 happens inside each BlockSpec index_map (leading dim
    squeezed to element 0) -> no per-forward HBM parameter copy.  The output is
    written at its logical (B, D_OUT) shape (no pad / slice dispatch around the
    kernel); a partial final batch tile is handled by Pallas dropping OOB stores.
    """
    b = x.shape[0]
    bm = _pick_bm(b)
    return pl.pallas_call(
        _mlp_kernel,
        out_shape=jax.ShapeDtypeStruct((b, D_OUT), jnp.float32),
        grid=(_cdiv(b, bm),),
        in_specs=[
            pl.BlockSpec((bm, D_IN), lambda i: (i, 0)),
            pl.BlockSpec((None, D_IN, D_HID_P), lambda i: (0, 0, 0)),    # slot 0
            pl.BlockSpec((None, 1, D_HID_P), lambda i: (0, 0, 0)),       # slot 0
            pl.BlockSpec((None, D_HID_P, D_OUT), lambda i: (0, 0, 0)),   # slot 0
            pl.BlockSpec((None, 1, D_OUT), lambda i: (0, 0, 0)),         # slot 0
        ],
        out_specs=pl.BlockSpec((bm, D_OUT), lambda i: (i, 0)),
        compiler_params=pltpu.CompilerParams(
            dimension_semantics=("parallel",)),
    )(x, w1_buf, b1_buf, w2_buf, b2_buf)


_forward_jit = jax.jit(user_model_forward)


# ----------------------------------------------------------------------------
# Kernel 2a: fused clip_grad_norm for grads that fit in VMEM (one launch, 2N bytes)
# ----------------------------------------------------------------------------
def _clip_fused_kernel(mn_ref, g_ref, o_ref):
    g = g_ref[...].astype(jnp.float32)
    total_norm = jnp.sqrt(jnp.sum(g * g))
    coef = jnp.minimum(mn_ref[0] / (total_norm + 1e-6), 1.0)
    o_ref[...] = (g * coef).astype(o_ref.dtype)


@jax.jit
def _clip_fused(max_norm, g2d):
    return pl.pallas_call(
        _clip_fused_kernel,
        out_shape=jax.ShapeDtypeStruct(g2d.shape, g2d.dtype),
        in_specs=[pl.BlockSpec(memory_space=pltpu.MemorySpace.SMEM),   # max_norm scalar
                  pl.BlockSpec(memory_space=pltpu.MemorySpace.VMEM)],
        out_specs=pl.BlockSpec(memory_space=pltpu.MemorySpace.VMEM),
    )(max_norm, g2d)


# ----------------------------------------------------------------------------
# Kernel 2b: streaming two-pass clip for large grads (~2 MiB tiles, 3N bytes)
#   pass 1: per-lane sum-of-squares partials, leading size-2 "parallel" axis so
#           v7x's two TensorCores each stream half the rows.
#   pass 2: g * clip_coef, coef delivered once via SMEM scalar.
# ----------------------------------------------------------------------------
def _sumsq_kernel(g_ref, part_ref, *, tile_r, total_rows, tiles_per_core):
    c = pl.program_id(0)
    i = pl.program_id(1)

    @pl.when(i == 0)
    def _():
        part_ref[...] = jnp.zeros_like(part_ref)

    g = g_ref[...].astype(jnp.float32)
    # Mask rows past the end of the array (partial last tile) and tiles whose
    # index was clamped because this core's range over-covers (fully masked).
    rows_left = total_rows - (c * tiles_per_core + i) * tile_r
    row_idx = lax.broadcasted_iota(jnp.int32, g.shape, 0)
    g = jnp.where(row_idx < rows_left, g, 0.0)
    part_ref[...] += jnp.sum(g * g, axis=0, keepdims=True)


def _scale_kernel(coef_ref, g_ref, o_ref):
    o_ref[...] = (g_ref[...].astype(jnp.float32) * coef_ref[0]).astype(o_ref.dtype)


@jax.jit
def _clip_two_pass(max_norm, g2d):
    rows, cols = g2d.shape
    tile_r = max(_SUBLANE, (_CLIP_TILE_BYTES // (cols * 4)) // _SUBLANE * _SUBLANE)
    tile_r = min(tile_r, _round_up(rows, _SUBLANE))
    n_tiles = _cdiv(rows, tile_r)
    n_split = min(2, n_tiles)                 # v7x: both TCs split the HBM stream
    tiles_per_core = _cdiv(n_tiles, n_split)

    # Pass 1: per-lane partial sums of squares, one (1, cols) slab per core.
    partials = pl.pallas_call(
        functools.partial(_sumsq_kernel, tile_r=tile_r, total_rows=rows,
                          tiles_per_core=tiles_per_core),
        out_shape=jax.ShapeDtypeStruct((n_split, 1, cols), jnp.float32),
        grid=(n_split, tiles_per_core),
        in_specs=[pl.BlockSpec(
            (tile_r, cols),
            lambda c, i: (jnp.minimum(c * tiles_per_core + i, n_tiles - 1), 0))],
        out_specs=pl.BlockSpec((None, 1, cols), lambda c, i: (c, 0, 0)),
        compiler_params=pltpu.CompilerParams(
            dimension_semantics=("parallel", "arbitrary")),
    )(g2d)

    total_norm = jnp.sqrt(jnp.sum(partials))
    coef = jnp.minimum(max_norm[0] / (total_norm + 1e-6), 1.0)
    coef = jnp.reshape(coef, (1,)).astype(jnp.float32)

    # Pass 2: stream the grad once more and scale; coef rides along in SMEM.
    return pl.pallas_call(
        _scale_kernel,
        out_shape=jax.ShapeDtypeStruct(g2d.shape, g2d.dtype),
        grid=(n_tiles,),
        in_specs=[pl.BlockSpec(memory_space=pltpu.MemorySpace.SMEM),
                  pl.BlockSpec((tile_r, cols), lambda i: (i, 0))],
        out_specs=pl.BlockSpec((tile_r, cols), lambda i: (i, 0)),
        compiler_params=pltpu.CompilerParams(
            dimension_semantics=("parallel",)),
    )(coef, g2d)


def _as_2d(grad):
    """Free (copy-less) 2-D view of a gradient."""
    n = grad.size
    if n % _LANE == 0:
        return grad.reshape(n // _LANE, _LANE)        # lane-dense
    if grad.ndim >= 2:
        return grad.reshape(-1, grad.shape[-1])       # collapse leading dims
    return grad.reshape(1, max(n, 1))


def clip_grad_norm(grad, max_norm=MAX_NORM, norm_type=2.0):
    """2-norm gradient clipping matching the reference clip_grad_norm
    (returns the clipped gradient, does not modify in place)."""
    # TODO(synk): norm_type=inf and error_if_nonfinite (host-side raise) are not
    # implemented; the grad_hook path only uses the default 2-norm.
    assert float(norm_type) == 2.0
    mn = jnp.full((1,), max_norm, jnp.float32)
    n = grad.size
    g2d = _as_2d(grad)
    # VMEM footprint of the whole grad after (8,128) layout padding.
    padded_bytes = (_round_up(g2d.shape[0], _SUBLANE)
                    * _round_up(g2d.shape[1], _LANE) * 4)
    if padded_bytes <= _FUSED_CLIP_LIMIT_BYTES:
        # Small/medium grads (all of this model's params): single fused kernel.
        return _clip_fused(mn, g2d).reshape(grad.shape)
    if g2d.shape[1] * 4 * _SUBLANE <= _CLIP_TILE_BYTES:
        # Large grads: streaming two-pass, ragged row tail masked in-kernel.
        # (Each distinct parameter shape compiles once; shapes are fixed per model.)
        return _clip_two_pass(mn, g2d).reshape(grad.shape)
    # TODO(synk): pathological shapes (huge ragged last dim / ragged 1-D grads)
    # take one extra padding copy instead of in-kernel tail masking.
    rows = _cdiv(n, _LANE)
    flat = jnp.pad(grad.reshape(-1), (0, rows * _LANE - n))
    out = _clip_two_pass(mn, flat.reshape(rows, _LANE))
    return out.reshape(-1)[:n].reshape(grad.shape)


# ----------------------------------------------------------------------------
# AdaModel wrapper (PS plumbing replaced by in-memory [2, ...] buffers)
# ----------------------------------------------------------------------------
class AdaModelJax:
    """Param buffers have leading dim 2: [live param, optimizer accumulator]."""

    def __init__(self, key):
        k1, k2, k3, k4 = jax.random.split(key, 4)
        w1 = jax.random.normal(k1, (D_IN, D_HID), jnp.float32) * 0.05
        b1 = jax.random.normal(k2, (D_HID,), jnp.float32) * 0.05
        w2 = jax.random.normal(k3, (D_HID, D_OUT), jnp.float32) * 0.05
        b2 = jax.random.normal(k4, (D_OUT,), jnp.float32) * 0.05
        # Lane-pad the hidden dim once at init (zero padding => identical math).
        w1p = jnp.zeros((D_IN, D_HID_P), jnp.float32).at[:, :D_HID].set(w1)
        b1p = jnp.zeros((1, D_HID_P), jnp.float32).at[0, :D_HID].set(b1)
        w2p = jnp.zeros((D_HID_P, D_OUT), jnp.float32).at[:D_HID, :].set(w2)
        b2p = b2.reshape(1, D_OUT)
        self._param_buffers = {
            "fc1.weight": jnp.stack([w1p, jnp.zeros_like(w1p)], axis=0),
            "fc1.bias": jnp.stack([b1p, jnp.zeros_like(b1p)], axis=0),
            "fc2.weight": jnp.stack([w2p, jnp.zeros_like(w2p)], axis=0),
            "fc2.bias": jnp.stack([b2p, jnp.zeros_like(b2p)], axis=0),
        }
        self.key_offset = 0
        self._clock = 0
        # TODO(synk): replace_embeddings / PSEmbedding swap has no equivalent
        # here (the demo user model contains no nn.Embedding).

    def forward(self, x):
        # kv.advance_clock(); pull(); user_model(x)
        # "pull" is implicit: the kernel BlockSpecs read slot 0 of each [2,...]
        # buffer directly, so there is no per-forward HBM parameter copy.
        # TODO(synk): kv.pull/push/intent RPCs, PSOptimizer.update_in_place and
        # autograd grad-hook registration are PS / autograd machinery with no
        # Pallas equivalent; clip_grad_norm (the hook's compute) is implemented.
        self._clock += 1
        b = self._param_buffers
        return _forward_jit(x, b["fc1.weight"], b["fc1.bias"],
                            b["fc2.weight"], b["fc2.bias"])


# ----------------------------------------------------------------------------
if __name__ == "__main__":
    key = jax.random.PRNGKey(0)
    kx, km, kg, kb, kr = jax.random.split(key, 5)

    model = AdaModelJax(km)
    x = jax.random.normal(kx, (BATCH, D_IN), jnp.float32)

    out = jax.block_until_ready(model.forward(x))
    assert out.shape == (BATCH, D_OUT)

    # Reference user-model forward in plain JAX (unpadded logical params).
    bufs = model._param_buffers
    w1 = bufs["fc1.weight"][0, :, :D_HID]
    b1 = bufs["fc1.bias"][0, 0, :D_HID]
    w2 = bufs["fc2.weight"][0, :D_HID, :]
    b2 = bufs["fc2.bias"][0, 0, :]
    ref_out = jnp.maximum(x @ w1 + b1, 0.0) @ w2 + b2
    assert jnp.allclose(out, ref_out, atol=1e-5, rtol=1e-4), "MLP mismatch"

    def clip_ref(g, mn=100.0):
        coef = jnp.minimum(mn / (jnp.linalg.norm(g) + 1e-6), 1.0)
        return g * coef

    # 1) Fused single-pass path (grad fits in VMEM), clipping active, ragged shape.
    grad = jax.random.normal(kg, (300, 130), jnp.float32) * 50.0
    clipped = jax.block_until_ready(clip_grad_norm(grad, 100.0))
    assert jnp.allclose(clipped, clip_ref(grad), atol=1e-3, rtol=1e-4), "fused clip mismatch"

    # 2) Fused path, no-clip branch (coef clamps to exactly 1 -> identity).
    grad_small = grad * 1e-3
    clipped_small = jax.block_until_ready(clip_grad_norm(grad_small, 100.0))
    assert jnp.allclose(clipped_small, grad_small, atol=1e-6, rtol=0.0)

    # 3) Streaming two-pass path, lane-dense view (n % 128 == 0), ~6 MiB grad.
    grad_big = jax.random.normal(kb, (1536, 1024), jnp.float32) * 5.0
    clipped_big = jax.block_until_ready(clip_grad_norm(grad_big, 100.0))
    assert jnp.allclose(clipped_big, clip_ref(grad_big), atol=1e-4, rtol=1e-4), \
        "two-pass clip mismatch"

    # 4) Streaming two-pass path, ragged rows masked in-kernel (n % 128 != 0).
    grad_rag = jax.random.normal(kr, (4200, 300), jnp.float32) * 3.0
    clipped_rag = jax.block_until_ready(clip_grad_norm(grad_rag, 100.0))
    assert jnp.allclose(clipped_rag, clip_ref(grad_rag), atol=1e-4, rtol=1e-4), \
        "ragged two-pass clip mismatch"

    print("KERNEL_OK")
</pallas_src>

<mosaic_0001>
module attributes {stable_mosaic.version = 11 : i64} {
  func.func @_mlp_kernel(%arg0: i32, %arg1: memref<128x32xf32, #tpu.memory_space<vmem>>, %arg2: memref<1x32x128xf32, #tpu.memory_space<vmem>>, %arg3: memref<1x1x128xf32, #tpu.memory_space<vmem>>, %arg4: memref<1x128x16xf32, #tpu.memory_space<vmem>>, %arg5: memref<1x1x16xf32, #tpu.memory_space<vmem>>, %arg6: memref<128x16xf32, #tpu.memory_space<vmem>>) attributes {dimension_semantics = [#tpu.dimension_semantics<parallel>], iteration_bounds = array<i64: 1>, scalar_prefetch = 0 : i64, scratch_operands = 0 : i64, tpu.core_type = #tpu.core_type<tc>, window_params = [{transform_indices = @transform_0, window_bounds = array<i64: 128, 32>}, {transform_indices = @transform_1, window_bounds = array<i64: 1, 32, 128>}, {transform_indices = @transform_2, window_bounds = array<i64: 1, 1, 128>}, {transform_indices = @transform_3, window_bounds = array<i64: 1, 128, 16>}, {transform_indices = @transform_4, window_bounds = array<i64: 1, 1, 16>}, {transform_indices = @transform_5, window_bounds = array<i64: 128, 16>}]} {
    %c0 = arith.constant 0 : index
    %c0_0 = arith.constant 0 : index
    %0 = vector.load %arg1[%c0, %c0_0] : memref<128x32xf32, #tpu.memory_space<vmem>>, vector<128x32xf32>
    %c0_1 = arith.constant 0 : index
    %c0_2 = arith.constant 0 : index
    %c0_3 = arith.constant 0 : index
    %1 = vector.load %arg2[%c0_1, %c0_2, %c0_3] : memref<1x32x128xf32, #tpu.memory_space<vmem>>, vector<1x32x128xf32>
    %2 = vector.shape_cast %1 : vector<1x32x128xf32> to vector<32x128xf32>
    %cst = arith.constant dense<0.000000e+00> : vector<128x128xf32>
    %3 = tpu.matmul %0, %2, %cst {dimension_numbers = #tpu.dot_dimension_numbers<[1], [0], [0], [1], [0, 0, 1, 1], [], []>} : vector<128x32xf32>, vector<32x128xf32>, vector<128x128xf32> -> vector<128x128xf32>
    %c0_4 = arith.constant 0 : index
    %c0_5 = arith.constant 0 : index
    %c0_6 = arith.constant 0 : index
    %4 = vector.load %arg3[%c0_4, %c0_5, %c0_6] : memref<1x1x128xf32, #tpu.memory_space<vmem>>, vector<1x1x128xf32>
    %5 = vector.shape_cast %4 : vector<1x1x128xf32> to vector<1x128xf32>
    %6 = vector.broadcast %5 : vector<1x128xf32> to vector<128x128xf32>
    %7 = arith.addf %3, %6 : vector<128x128xf32>
    %cst_7 = arith.constant 0.000000e+00 : f32
    %8 = vector.broadcast %cst_7 : f32 to vector<128x128xf32>
    %9 = arith.maximumf %7, %8 : vector<128x128xf32>
    %c0_8 = arith.constant 0 : index
    %c0_9 = arith.constant 0 : index
    %c0_10 = arith.constant 0 : index
    %10 = vector.load %arg4[%c0_8, %c0_9, %c0_10] : memref<1x128x16xf32, #tpu.memory_space<vmem>>, vector<1x128x16xf32>
    %11 = vector.shape_cast %10 : vector<1x128x16xf32> to vector<128x16xf32>
    %cst_11 = arith.constant dense<0.000000e+00> : vector<128x16xf32>
    %12 = tpu.matmul %9, %11, %cst_11 {dimension_numbers = #tpu.dot_dimension_numbers<[1], [0], [0], [1], [0, 0, 1, 1], [], []>} : vector<128x128xf32>, vector<128x16xf32>, vector<128x16xf32> -> vector<128x16xf32>
    %c0_12 = arith.constant 0 : index
    %c0_13 = arith.constant 0 : index
    %c0_14 = arith.constant 0 : index
    %13 = vector.load %arg5[%c0_12, %c0_13, %c0_14] : memref<1x1x16xf32, #tpu.memory_space<vmem>>, vector<1x1x16xf32>
    %14 = vector.shape_cast %13 : vector<1x1x16xf32> to vector<1x16xf32>
    %15 = vector.broadcast %14 : vector<1x16xf32> to vector<128x16xf32>
    %16 = arith.addf %12, %15 : vector<128x16xf32>
    %c0_15 = arith.constant 0 : index
    %c0_16 = arith.constant 0 : index
    %17 = vector.load %arg6[%c0_15, %c0_16] : memref<128x16xf32, #tpu.memory_space<vmem>>, vector<128x16xf32>
    tpu.vector_store %arg6[%c0_15, %c0_16], %16 {strides = array<i32>} : memref<128x16xf32, #tpu.memory_space<vmem>>, vector<128x16xf32>,
    return
  }
  func.func @transform_0(%arg0: i32) -> (i32, i32) {
    %c0_i32 = arith.constant 0 : i32
    %c0_i32_0 = arith.constant 0 : i32
    return %arg0, %c0_i32 : i32, i32
  }
  func.func @transform_1(%arg0: i32) -> (i32, i32, i32) {
    %c0_i32 = arith.constant 0 : i32
    %c0_i32_0 = arith.constant 0 : i32
    %c0_i32_1 = arith.constant 0 : i32
    %c0_i32_2 = arith.constant 0 : i32
    return %c0_i32, %c0_i32_0, %c0_i32_1 : i32, i32, i32
  }
  func.func @transform_2(%arg0: i32) -> (i32, i32, i32) {
    %c0_i32 = arith.constant 0 : i32
    %c0_i32_0 = arith.constant 0 : i32
    %c0_i32_1 = arith.constant 0 : i32
    %c0_i32_2 = arith.constant 0 : i32
    return %c0_i32, %c0_i32_0, %c0_i32_1 : i32, i32, i32
  }
  func.func @transform_3(%arg0: i32) -> (i32, i32, i32) {
    %c0_i32 = arith.constant 0 : i32
    %c0_i32_0 = arith.constant 0 : i32
    %c0_i32_1 = arith.constant 0 : i32
    %c0_i32_2 = arith.constant 0 : i32
    return %c0_i32, %c0_i32_0, %c0_i32_1 : i32, i32, i32
  }
  func.func @transform_4(%arg0: i32) -> (i32, i32, i32) {
    %c0_i32 = arith.constant 0 : i32
    %c0_i32_0 = arith.constant 0 : i32
    %c0_i32_1 = arith.constant 0 : i32
    %c0_i32_2 = arith.constant 0 : i32
    return %c0_i32, %c0_i32_0, %c0_i32_1 : i32, i32, i32
  }
  func.func @transform_5(%arg0: i32) -> (i32, i32) {
    %c0_i32 = arith.constant 0 : i32
    %c0_i32_0 = arith.constant 0 : i32
    return %arg0, %c0_i32 : i32, i32
  }
}

</mosaic_0001>

<llo_original>
// kernel: user_model_forward.1
$region0: #{user_model_forward.1}
  #allocation0 [shape = 'u32[]', space=smem, size = 0x4, offset = 0x4, fixed_abs, tag = 'smem constant byte address 0x4 - core index']
  #allocation1 [shape = 'u32[72,128]{1,0:T(1,128)}', space=vmem, size = 0x9000, scoped, tag = 'internal scratch']
  %s0 = inlined_call_operand.vmem [shape: f32[128,32], index: 0, kind: input, shape index: {}]
  %s1 = inlined_call_operand.vmem [shape: f32[2,32,128], index: 1, kind: input, shape index: {}]
  %s2 = inlined_call_operand.vmem [shape: f32[2,1,128], index: 2, kind: input, shape index: {}]
  %s3 = inlined_call_operand.vmem [shape: f32[2,128,16], index: 3, kind: input, shape index: {}]
  %s4 = inlined_call_operand.vmem [shape: f32[2,1,16], index: 4, kind: input, shape index: {}]
  %s5 = inlined_call_operand.vmem [shape: f32[128,16], index: 5, kind: output, shape index: {}]
  %s6 = sld [smem:[#allocation0]]
  $region30: #{user_model_forward.1} parent=0
    _
  %s8 = ssub.s32 1, %s6
  %s9 = scalar_select 0, %s8, %s6
  // Predicated region
  $region2: #{user_model_forward.1} parent=0 // pred_check
    _
  $region3: #{user_model_forward.1} parent=0 // pred_check_branch
    %11 = sbr.rel (0) target = $region5
  $region4: #{user_model_forward.1} parent=0 // pred_region
    _
  $region5: #{user_model_forward.1} parent=0 // pred_fallthru
    _
  // Predicated region
  $region6: #{user_model_forward.1} parent=0 // pred_check
    _
  $region7: #{user_model_forward.1} parent=0 // pred_check_branch
    %13 = sbr.rel (0) target = $region9
  $region8: #{user_model_forward.1} parent=0 // pred_region
    _
  $region9: #{user_model_forward.1} parent=0 // pred_fallthru
    _
  // Predicated region
  $region10: #{user_model_forward.1} parent=0 // pred_check
    _
  $region11: #{user_model_forward.1} parent=0 // pred_check_branch
    %15 = sbr.rel (0) target = $region13
  $region12: #{user_model_forward.1} parent=0 // pred_region
    _
  $region13: #{user_model_forward.1} parent=0 // pred_fallthru
    _
  // Predicated region
  $region14: #{user_model_forward.1} parent=0 // pred_check
    _
  $region15: #{user_model_forward.1} parent=0 // pred_check_branch
    %17 = sbr.rel (0) target = $region17
  $region16: #{user_model_forward.1} parent=0 // pred_region
    _
  $region17: #{user_model_forward.1} parent=0 // pred_fallthru
    _
  // Predicated region
  $region18: #{user_model_forward.1} parent=0 // pred_check
    _
  $region19: #{user_model_forward.1} parent=0 // pred_check_branch
    %19 = sbr.rel (0) target = $region21
  $region20: #{user_model_forward.1} parent=0 // pred_region
    _
  $region21: #{user_model_forward.1} parent=0 // pred_fallthru
    _
  %v20 = vld [vmem:[%s0] sm:$0xff]
  %v21 = vld [vmem:[%s0 + $0x8] sm:$0xff]
  %v22 = vld [vmem:[%s0 + $0x10] sm:$0xff]
  %v23 = vld [vmem:[%s0 + $0x18] sm:$0xff]
  %v24 = vld [vmem:[%s0 + $0x20] sm:$0xff]
  %v25 = vld [vmem:[%s0 + $0x28] sm:$0xff]
  %v26 = vld [vmem:[%s0 + $0x30] sm:$0xff]
  %v27 = vld [vmem:[%s0 + $0x38] sm:$0xff]
  %v28 = vld [vmem:[%s0 + $0x40] sm:$0xff]
  %v29 = vld [vmem:[%s0 + $0x48] sm:$0xff]
  %v30 = vld [vmem:[%s0 + $0x50] sm:$0xff]
  %v31 = vld [vmem:[%s0 + $0x58] sm:$0xff]
  %v32 = vld [vmem:[%s0 + $0x60] sm:$0xff]
  %v33 = vld [vmem:[%s0 + $0x68] sm:$0xff]
  %v34 = vld [vmem:[%s0 + $0x70] sm:$0xff]
  %v35 = vld [vmem:[%s0 + $0x78] sm:$0xff]
  %v36 = vld [vmem:[%s1] sm:$0xff]
  %v37 = vld [vmem:[%s1 + $0x8] sm:$0xff]
  %v38 = vld [vmem:[%s1 + $0x10] sm:$0xff]
  %v39 = vld [vmem:[%s1 + $0x18] sm:$0xff]
  %v40 = vld [vmem:[%s2] sm:$0x1]
  %v42 = vperm.slane %v40, 0
  %vm44 = vcmask 261120
  %v46 = vsel %vm44, %v20, 0
  %v49 = vsel %vm44, %v21, 0
  %v52 = vsel %vm44, %v22, 0
  %v55 = vsel %vm44, %v23, 0
  %v58 = vsel %vm44, %v24, 0
  %v61 = vsel %vm44, %v25, 0
  %v64 = vsel %vm44, %v26, 0
  %v67 = vsel %vm44, %v27, 0
  %v70 = vsel %vm44, %v28, 0
  %v73 = vsel %vm44, %v29, 0
  %v76 = vsel %vm44, %v30, 0
  %v79 = vsel %vm44, %v31, 0
  %v82 = vsel %vm44, %v32, 0
  %v85 = vsel %vm44, %v33, 0
  %v88 = vsel %vm44, %v34, 0
  %v91 = vsel %vm44, %v35, 0
  %93 = vmatpush.msra.mxu0 0.0
  %94 = vmatpush.msra.mxu0 0.0
  %95 = vmatpush.msra.mxu0 0.0
  %96 = vmatpush.msra.mxu0 0.0
  %97 = vmatpush.msra.mxu0 0.0
  %98 = vmatpush.msra.mxu0 0.0
  %99 = vmatpush.msra.mxu0 0.0
  %100 = vmatpush.msra.mxu0 0.0
  %101 = vmatpush.msra.mxu0 0.0
  %102 = vmatpush.msra.mxu0 0.0
  %103 = vmatpush.msra.mxu0 0.0
  %104 = vmatpush.msra.mxu0 0.0
  %105 = vmatpush.msra.mxu0 %v39
  %106 = vmatpush.msra.mxu0 %v38
  %107 = vmatpush.msra.mxu0 %v37
  %108 = vmatpush.msra.mxu0 %v36
  %109 = vmatmul.f32.gmra.mxu0 %v46
  %v110 = vpop.f32.mrf.mxu0
  %v111 = vadd.f32 %v42, %v110
  %112 = vmatmul.f32.gmra.mxu0 %v49
  %v113 = vpop.f32.mrf.mxu0
  %v114 = vadd.f32 %v42, %v113
  %115 = vmatmul.f32.gmra.mxu0 %v52
  %v116 = vpop.f32.mrf.mxu0
  %v117 = vadd.f32 %v42, %v116
  %118 = vmatmul.f32.gmra.mxu0 %v55
  %v119 = vpop.f32.mrf.mxu0
  %v120 = vadd.f32 %v42, %v119
  %121 = vmatmul.f32.gmra.mxu0 %v58
  %v122 = vpop.f32.mrf.mxu0
  %v123 = vadd.f32 %v42, %v122
  %124 = vmatmul.f32.gmra.mxu0 %v61
  %v125 = vpop.f32.mrf.mxu0
  %v126 = vadd.f32 %v42, %v125
  %127 = vmatmul.f32.gmra.mxu0 %v64
  %v128 = vpop.f32.mrf.mxu0
  %v129 = vadd.f32 %v42, %v128
  %130 = vmatmul.f32.gmra.mxu0 %v67
  %v131 = vpop.f32.mrf.mxu0
  %v132 = vadd.f32 %v42, %v131
  %133 = vmatmul.f32.gmra.mxu0 %v70
  %v134 = vpop.f32.mrf.mxu0
  %v135 = vadd.f32 %v42, %v134
  %136 = vmatmul.f32.gmra.mxu0 %v73
  %v137 = vpop.f32.mrf.mxu0
  %v138 = vadd.f32 %v42, %v137
  %139 = vmatmul.f32.gmra.mxu0 %v76
  %v140 = vpop.f32.mrf.mxu0
  %v141 = vadd.f32 %v42, %v140
  %142 = vmatmul.f32.gmra.mxu0 %v79
  %v143 = vpop.f32.mrf.mxu0
  %v144 = vadd.f32 %v42, %v143
  %145 = vmatmul.f32.gmra.mxu0 %v82
  %v146 = vpop.f32.mrf.mxu0
  %v147 = vadd.f32 %v42, %v146
  %148 = vmatmul.f32.gmra.mxu0 %v85
  %v149 = vpop.f32.mrf.mxu0
  %v150 = vadd.f32 %v42, %v149
  %151 = vmatmul.f32.gmra.mxu0 %v88
  %v152 = vpop.f32.mrf.mxu0
  %v153 = vadd.f32 %v42, %v152
  %154 = vmatmul.f32.gmra.mxu0 %v91
  %v155 = vpop.f32.mrf.mxu0
  %v156 = vadd.f32 %v42, %v155
  %157 = vdwg.mxu0
  %v158 = vmax.f32 %v111, 0.0
  %v159 = vmax.f32 %v114, 0.0
  %v160 = vmax.f32 %v117, 0.0
  %v161 = vmax.f32 %v120, 0.0
  %v162 = vmax.f32 %v123, 0.0
  %v163 = vmax.f32 %v126, 0.0
  %v164 = vmax.f32 %v129, 0.0
  %v165 = vmax.f32 %v132, 0.0
  %v166 = vmax.f32 %v135, 0.0
  %v167 = vmax.f32 %v138, 0.0
  %v168 = vmax.f32 %v141, 0.0
  %v169 = vmax.f32 %v144, 0.0
  %v170 = vmax.f32 %v147, 0.0
  %v171 = vmax.f32 %v150, 0.0
  %v172 = vmax.f32 %v153, 0.0
  %v173 = vmax.f32 %v156, 0.0
  %v174 = vld [vmem:[%s3] sm:$0xff]
  %v175 = vld [vmem:[%s3 + $0x8] sm:$0xff]
  %v176 = vld [vmem:[%s3 + $0x10] sm:$0xff]
  %v177 = vld [vmem:[%s3 + $0x18] sm:$0xff]
  %v178 = vld [vmem:[%s3 + $0x20] sm:$0xff]
  %v179 = vld [vmem:[%s3 + $0x28] sm:$0xff]
  %v180 = vld [vmem:[%s3 + $0x30] sm:$0xff]
  %v181 = vld [vmem:[%s3 + $0x38] sm:$0xff]
  %v182 = vld [vmem:[%s3 + $0x40] sm:$0xff]
  %v183 = vld [vmem:[%s3 + $0x48] sm:$0xff]
  %v184 = vld [vmem:[%s3 + $0x50] sm:$0xff]
  %v185 = vld [vmem:[%s3 + $0x58] sm:$0xff]
  %v186 = vld [vmem:[%s3 + $0x60] sm:$0xff]
  %v187 = vld [vmem:[%s3 + $0x68] sm:$0xff]
  %v188 = vld [vmem:[%s3 + $0x70] sm:$0xff]
  %v189 = vld [vmem:[%s3 + $0x78] sm:$0xff]
  %v190 = vld [vmem:[%s4] sm:$0x1]
  %v192 = vperm.slane %v190, 0
  %194 = vmatpush.msra.mxu0 %v189
  %195 = vmatpush.msra.mxu0 %v188
  %196 = vmatpush.msra.mxu0 %v187
  %197 = vmatpush.msra.mxu0 %v186
  %198 = vmatpush.msra.mxu0 %v185
  %199 = vmatpush.msra.mxu0 %v184
  %200 = vmatpush.msra.mxu0 %v183
  %201 = vmatpush.msra.mxu0 %v182
  %202 = vmatpush.msra.mxu0 %v181
  %203 = vmatpush.msra.mxu0 %v180
  %204 = vmatpush.msra.mxu0 %v179
  %205 = vmatpush.msra.mxu0 %v178
  %206 = vmatpush.msra.mxu0 %v177
  %207 = vmatpush.msra.mxu0 %v176
  %208 = vmatpush.msra.mxu0 %v175
  %209 = vmatpush.msra.mxu0 %v174
  %210 = vmatmul.f32.gmra.mxu0 %v158
  %v211 = vpop.f32.mrf.mxu0
  %v212 = vadd.f32 %v192, %v211
  %213 = vmatmul.f32.gmra.mxu0 %v159
  %v214 = vpop.f32.mrf.mxu0
  %v215 = vadd.f32 %v192, %v214
  %216 = vmatmul.f32.gmra.mxu0 %v160
  %v217 = vpop.f32.mrf.mxu0
  %v218 = vadd.f32 %v192, %v217
  %219 = vmatmul.f32.gmra.mxu0 %v161
  %v220 = vpop.f32.mrf.mxu0
  %v221 = vadd.f32 %v192, %v220
  %222 = vmatmul.f32.gmra.mxu0 %v162
  %v223 = vpop.f32.mrf.mxu0
  %v224 = vadd.f32 %v192, %v223
  %225 = vmatmul.f32.gmra.mxu0 %v163
  %v226 = vpop.f32.mrf.mxu0
  %v227 = vadd.f32 %v192, %v226
  %228 = vmatmul.f32.gmra.mxu0 %v164
  %v229 = vpop.f32.mrf.mxu0
  %v230 = vadd.f32 %v192, %v229
  %231 = vmatmul.f32.gmra.mxu0 %v165
  %v232 = vpop.f32.mrf.mxu0
  %v233 = vadd.f32 %v192, %v232
  %234 = vmatmul.f32.gmra.mxu0 %v166
  %v235 = vpop.f32.mrf.mxu0
  %v236 = vadd.f32 %v192, %v235
  %237 = vmatmul.f32.gmra.mxu0 %v167
  %v238 = vpop.f32.mrf.mxu0
  %v239 = vadd.f32 %v192, %v238
  %240 = vmatmul.f32.gmra.mxu0 %v168
  %v241 = vpop.f32.mrf.mxu0
  %v242 = vadd.f32 %v192, %v241
  %243 = vmatmul.f32.gmra.mxu0 %v169
  %v244 = vpop.f32.mrf.mxu0
  %v245 = vadd.f32 %v192, %v244
  %246 = vmatmul.f32.gmra.mxu0 %v170
  %v247 = vpop.f32.mrf.mxu0
  %v248 = vadd.f32 %v192, %v247
  %249 = vmatmul.f32.gmra.mxu0 %v171
  %v250 = vpop.f32.mrf.mxu0
  %v251 = vadd.f32 %v192, %v250
  %252 = vmatmul.f32.gmra.mxu0 %v172
  %v253 = vpop.f32.mrf.mxu0
  %v254 = vadd.f32 %v192, %v253
  %255 = vmatmul.f32.gmra.mxu0 %v173
  %v256 = vpop.f32.mrf.mxu0
  %v257 = vadd.f32 %v192, %v256
  %258 = vdwg.mxu0
  %vm259 = vcmask 130048
  %260 = vst.msk [vmem:[%s5] sm:$0xff] %vm259, %v212
  %261 = vst.msk [vmem:[%s5 + $0x8] sm:$0xff] %vm259, %v215
  %262 = vst.msk [vmem:[%s5 + $0x10] sm:$0xff] %vm259, %v218
  %263 = vst.msk [vmem:[%s5 + $0x18] sm:$0xff] %vm259, %v221
  %264 = vst.msk [vmem:[%s5 + $0x20] sm:$0xff] %vm259, %v224
  %265 = vst.msk [vmem:[%s5 + $0x28] sm:$0xff] %vm259, %v227
  %266 = vst.msk [vmem:[%s5 + $0x30] sm:$0xff] %vm259, %v230
  %267 = vst.msk [vmem:[%s5 + $0x38] sm:$0xff] %vm259, %v233
  %268 = vst.msk [vmem:[%s5 + $0x40] sm:$0xff] %vm259, %v236
  %269 = vst.msk [vmem:[%s5 + $0x48] sm:$0xff] %vm259, %v239
  %270 = vst.msk [vmem:[%s5 + $0x50] sm:$0xff] %vm259, %v242
  %271 = vst.msk [vmem:[%s5 + $0x58] sm:$0xff] %vm259, %v245
  %272 = vst.msk [vmem:[%s5 + $0x60] sm:$0xff] %vm259, %v248
  %273 = vst.msk [vmem:[%s5 + $0x68] sm:$0xff] %vm259, %v251
  %274 = vst.msk [vmem:[%s5 + $0x70] sm:$0xff] %vm259, %v254
  %275 = vst.msk [vmem:[%s5 + $0x78] sm:$0xff] %vm259, %v257
  // Predicated region
  $region22: #{user_model_forward.1} parent=0 // pred_check
    _
  $region23: #{user_model_forward.1} parent=0 // pred_check_branch
    %277 = sbr.rel (0) target = $region25
  $region24: #{user_model_forward.1} parent=0 // pred_region
    _
  $region25: #{user_model_forward.1} parent=0 // pred_fallthru
    _
  // Predicated region
  $region26: #{user_model_forward.1} parent=0 // pred_check
    _
  $region27: #{user_model_forward.1} parent=0 // pred_check_branch
    %279 = sbr.rel (0) target = $region29
  $region28: #{user_model_forward.1} parent=0 // pred_region
    _
  $region29: #{user_model_forward.1} parent=0 // pred_fallthru
    _

</llo_original>
